<compile_context>
chip_gen: v7x
topology: tpu7x:2x2x1
jax: 0.10.0
libtpu: 0.0.40
codegen_flags: <defaults>
</compile_context>

<pallas_src>
import functools

import jax
import jax.numpy as jnp
from jax.experimental import pallas as pl
from jax.experimental.pallas import tpu as pltpu


def _yolo_kernel(offs_ref, anc_ref, pred_ref, out_ref, *, stride):
    # offs_ref : VMEM (2, gg)  f32  -- [cx*stride ; cy*stride], resident across steps
    # anc_ref  : VMEM (blk, 2, 1) f32 -- per-slab ((a_w/stride)*stride, (a_h/stride)*stride)
    # pred_ref : VMEM (blk, attrs, gg)
    # out_ref  : VMEM (blk, attrs, gg) f32
    p = pred_ref[...].astype(jnp.float32)                     # cast inside (bf16-friendly)
    offs = offs_ref[...][None, :, :]                          # (1, 2, gg)

    # rows 0..1: (sigmoid(x) + cx) * stride  ==  sigmoid(x)*stride + cx*stride
    out_ref[:, 0:2, :] = jax.nn.sigmoid(p[:, 0:2, :]) * stride + offs
    # rows 2..3: exp(w/h) * anchor (stride already folded into anchors)
    out_ref[:, 2:4, :] = jnp.exp(p[:, 2:4, :]) * anc_ref[...]
    # rows 4.. : objectness + class probs -> sigmoid only
    out_ref[:, 4:, :] = jax.nn.sigmoid(p[:, 4:, :])


def yolo_layer(x, anchors, num_classes, image_dim, *, max_block_bytes=8 * 1024 * 1024):
    """Inference forward of YoloLayer. x: (bs, A*(5+nc), g, g) NCHW."""
    bs, chan, g, g2 = x.shape
    assert g == g2
    num_anchors = len(anchors)
    attrs = 5 + num_classes
    assert chan == num_anchors * attrs
    stride = float(image_dim) / float(g)
    gg = g * g
    n_slabs = bs * num_anchors

    # (bs, A*attrs, g, g) -> (bs*A, attrs, g*g): lane-dense slabs.
    pred = x.reshape(n_slabs, attrs, gg)

    # Grid-cell offsets with stride pre-folded, kept resident in VMEM.
    cx = jnp.tile(jnp.arange(g, dtype=jnp.float32), g)        # col % g
    cy = jnp.repeat(jnp.arange(g, dtype=jnp.float32), g)      # col // g
    offs = jnp.stack([cx, cy], axis=0) * stride               # (2, gg)

    # Per-slab anchor scales ((a/stride)*stride), broadcast over lanes in-kernel.
    anc = jnp.asarray(anchors, dtype=jnp.float32) / stride * stride   # (A, 2)
    anc = jnp.tile(anc, (bs, 1)).reshape(n_slabs, 2, 1)                # (bs*A, 2, 1)

    # Pick the largest block count of slabs that (a) divides n_slabs and
    # (b) keeps 2x(double-buffered in + out) comfortably under the scoped
    # VMEM limit (sized conservatively so it also fits v7x's 64 MiB VMEM).
    slab_bytes = attrs * gg * 4                                # f32 accounting
    b_target = int(min(n_slabs, max(1, max_block_bytes // slab_bytes)))
    blk = 1
    for d in range(b_target, 0, -1):
        if n_slabs % d == 0:
            blk = d
            break

    kernel = functools.partial(_yolo_kernel, stride=stride)

    out = pl.pallas_call(
        kernel,
        out_shape=jax.ShapeDtypeStruct((n_slabs, attrs, gg), jnp.float32),
        grid=(n_slabs // blk,),
        in_specs=[
            pl.BlockSpec((2, gg), lambda i: (0, 0)),            # resident offsets
            pl.BlockSpec((blk, 2, 1), lambda i: (i, 0, 0)),     # per-slab anchors
            pl.BlockSpec((blk, attrs, gg), lambda i: (i, 0, 0)),
        ],
        out_specs=pl.BlockSpec((blk, attrs, gg), lambda i: (i, 0, 0)),
        compiler_params=pltpu.CompilerParams(
            dimension_semantics=("parallel",),                  # independent slabs (2 TCs on v7x)
            vmem_limit_bytes=48 * 1024 * 1024,
        ),
    )(offs, anc, pred)

    # Layout glue back to the PyTorch output layout: (bs, A*g*g, attrs).
    # TODO(synk): a layout-aware consumer could take (bs*A, attrs, g*g) directly
    # and skip this transpose (it re-reads/re-writes the tensor in HBM).
    out = out.reshape(bs, num_anchors, attrs, g, g)
    out = jnp.transpose(out, (0, 1, 3, 4, 2))
    return out.reshape(bs, num_anchors * gg, attrs)


def yolo_layer_ref(x, anchors, num_classes, image_dim):
    """Pure-JAX reference mirroring the PyTorch forward (inference branch)."""
    bs, _, g, _ = x.shape
    num_anchors = len(anchors)
    attrs = 5 + num_classes
    stride = float(image_dim) / float(g)
    pred = x.astype(jnp.float32).reshape(bs, num_anchors, attrs, g, g)
    pred = jnp.transpose(pred, (0, 1, 3, 4, 2))                # (bs, A, g, g, attrs)
    xs = jax.nn.sigmoid(pred[..., 0])
    ys = jax.nn.sigmoid(pred[..., 1])
    w = pred[..., 2]
    h = pred[..., 3]
    conf = jax.nn.sigmoid(pred[..., 4])
    cls = jax.nn.sigmoid(pred[..., 5:])
    cx = jnp.arange(g, dtype=jnp.float32)[None, None, None, :]
    cy = jnp.arange(g, dtype=jnp.float32)[None, None, :, None]
    sa = jnp.asarray(anchors, dtype=jnp.float32) / stride
    pw = sa[:, 0][None, :, None, None]
    ph = sa[:, 1][None, :, None, None]
    boxes = jnp.stack([xs + cx, ys + cy, jnp.exp(w) * pw, jnp.exp(h) * ph], -1)
    out = jnp.concatenate(
        [boxes.reshape(bs, -1, 4) * stride,
         conf.reshape(bs, -1, 1),
         cls.reshape(bs, -1, num_classes)], axis=-1)
    return out


if __name__ == "__main__":
    # Small deterministic example consistent with the module's forward:
    # anchors in image-pixel units, num_classes=4 -> bbox_attrs=9,
    # channels = num_anchors * bbox_attrs = 27, spatial g=16, image_dim=64.
    anchors = [(10.0, 13.0), (16.0, 30.0), (33.0, 23.0)]
    num_classes = 4
    image_dim = 64
    bs, g = 2, 16
    attrs = 5 + num_classes
    chan = len(anchors) * attrs

    key = jax.random.PRNGKey(0)
    x = jax.random.normal(key, (bs, chan, g, g), dtype=jnp.float32)

    out = yolo_layer(x, anchors, num_classes, image_dim)
    out = jax.block_until_ready(out)

    ref = yolo_layer_ref(x, anchors, num_classes, image_dim)
    assert out.shape == (bs, len(anchors) * g * g, attrs), out.shape
    assert jnp.allclose(out, ref, atol=1e-5, rtol=1e-5), "mismatch vs reference"

    print("KERNEL_OK")
</pallas_src>

<mosaic_0001>
module attributes {stable_mosaic.version = 11 : i64} {
  func.func @_yolo_kernel(%arg0: i32, %arg1: memref<2x256xf32, #tpu.memory_space<vmem>>, %arg2: memref<6x2x1xf32, #tpu.memory_space<vmem>>, %arg3: memref<6x9x256xf32, #tpu.memory_space<vmem>>, %arg4: memref<6x9x256xf32, #tpu.memory_space<vmem>>) attributes {dimension_semantics = [#tpu.dimension_semantics<parallel>], iteration_bounds = array<i64: 1>, scalar_prefetch = 0 : i64, scratch_operands = 0 : i64, tpu.core_type = #tpu.core_type<tc>, window_params = [{pipeline_mode = #tpu.pipeline_mode<synchronous>, transform_indices = @transform_0, window_bounds = array<i64: 2, 256>}, {transform_indices = @transform_1, window_bounds = array<i64: 6, 2, 1>}, {transform_indices = @transform_2, window_bounds = array<i64: 6, 9, 256>}, {transform_indices = @transform_3, window_bounds = array<i64: 6, 9, 256>}]} {
    %c0 = arith.constant 0 : index
    %c0_0 = arith.constant 0 : index
    %c0_1 = arith.constant 0 : index
    %0 = vector.load %arg3[%c0, %c0_0, %c0_1] : memref<6x9x256xf32, #tpu.memory_space<vmem>>, vector<6x9x256xf32>
    %c0_2 = arith.constant 0 : index
    %c0_3 = arith.constant 0 : index
    %1 = vector.load %arg1[%c0_2, %c0_3] : memref<2x256xf32, #tpu.memory_space<vmem>>, vector<2x256xf32>
    %2 = vector.shape_cast %1 : vector<2x256xf32> to vector<1x2x256xf32>
    %3 = vector.extract_strided_slice %0 {offsets = [0, 0, 0], sizes = [6, 2, 256], strides = [1, 1, 1]} : vector<6x9x256xf32> to vector<6x2x256xf32>
    %4 = arith.negf %3 : vector<6x2x256xf32>
    %5 = math.exp %4 : vector<6x2x256xf32>
    %cst = arith.constant 1.000000e+00 : f32
    %6 = vector.broadcast %cst : f32 to vector<6x2x256xf32>
    %7 = arith.addf %6, %5 : vector<6x2x256xf32>
    %8 = arith.divf %6, %7 : vector<6x2x256xf32>
    %cst_4 = arith.constant 4.000000e+00 : f32
    %9 = vector.broadcast %cst_4 : f32 to vector<6x2x256xf32>
    %10 = arith.mulf %8, %9 : vector<6x2x256xf32>
    %11 = vector.broadcast %2 : vector<1x2x256xf32> to vector<6x2x256xf32>
    %12 = arith.addf %10, %11 : vector<6x2x256xf32>
    %c0_5 = arith.constant 0 : index
    %c0_6 = arith.constant 0 : index
    %c0_7 = arith.constant 0 : index
    %13 = vector.load %arg4[%c0_5, %c0_6, %c0_7] : memref<6x9x256xf32, #tpu.memory_space<vmem>>, vector<6x2x256xf32>
    tpu.vector_store %arg4[%c0_5, %c0_6, %c0_7], %12 {strides = array<i32>} : memref<6x9x256xf32, #tpu.memory_space<vmem>>, vector<6x2x256xf32>,
    %14 = vector.extract_strided_slice %0 {offsets = [0, 2, 0], sizes = [6, 2, 256], strides = [1, 1, 1]} : vector<6x9x256xf32> to vector<6x2x256xf32>
    %15 = math.exp %14 : vector<6x2x256xf32>
    %c0_8 = arith.constant 0 : index
    %c0_9 = arith.constant 0 : index
    %c0_10 = arith.constant 0 : index
    %16 = vector.load %arg2[%c0_8, %c0_9, %c0_10] : memref<6x2x1xf32, #tpu.memory_space<vmem>>, vector<6x2x1xf32>
    %17 = vector.broadcast %16 : vector<6x2x1xf32> to vector<6x2x256xf32>
    %18 = arith.mulf %15, %17 : vector<6x2x256xf32>
    %c0_11 = arith.constant 0 : index
    %c2 = arith.constant 2 : index
    %c0_12 = arith.constant 0 : index
    %19 = vector.load %arg4[%c0_11, %c2, %c0_12] : memref<6x9x256xf32, #tpu.memory_space<vmem>>, vector<6x2x256xf32>
    tpu.vector_store %arg4[%c0_11, %c2, %c0_12], %18 {strides = array<i32>} : memref<6x9x256xf32, #tpu.memory_space<vmem>>, vector<6x2x256xf32>,
    %20 = vector.extract_strided_slice %0 {offsets = [0, 4, 0], sizes = [6, 5, 256], strides = [1, 1, 1]} : vector<6x9x256xf32> to vector<6x5x256xf32>
    %21 = arith.negf %20 : vector<6x5x256xf32>
    %22 = math.exp %21 : vector<6x5x256xf32>
    %cst_13 = arith.constant 1.000000e+00 : f32
    %23 = vector.broadcast %cst_13 : f32 to vector<6x5x256xf32>
    %24 = arith.addf %23, %22 : vector<6x5x256xf32>
    %25 = arith.divf %23, %24 : vector<6x5x256xf32>
    %c0_14 = arith.constant 0 : index
    %c4 = arith.constant 4 : index
    %c0_15 = arith.constant 0 : index
    %26 = vector.load %arg4[%c0_14, %c4, %c0_15] : memref<6x9x256xf32, #tpu.memory_space<vmem>>, vector<6x5x256xf32>
    tpu.vector_store %arg4[%c0_14, %c4, %c0_15], %25 {strides = array<i32>} : memref<6x9x256xf32, #tpu.memory_space<vmem>>, vector<6x5x256xf32>,
    return
  }
  func.func @transform_0(%arg0: i32) -> (i32, i32) {
    %c0_i32 = arith.constant 0 : i32
    %c0_i32_0 = arith.constant 0 : i32
    %c0_i32_1 = arith.constant 0 : i32
    return %c0_i32, %c0_i32_0 : i32, i32
  }
  func.func @transform_1(%arg0: i32) -> (i32, i32, i32) {
    %c0_i32 = arith.constant 0 : i32
    %c0_i32_0 = arith.constant 0 : i32
    %c0_i32_1 = arith.constant 0 : i32
    return %arg0, %c0_i32, %c0_i32_0 : i32, i32, i32
  }
  func.func @transform_2(%arg0: i32) -> (i32, i32, i32) {
    %c0_i32 = arith.constant 0 : i32
    %c0_i32_0 = arith.constant 0 : i32
    %c0_i32_1 = arith.constant 0 : i32
    return %arg0, %c0_i32, %c0_i32_0 : i32, i32, i32
  }
  func.func @transform_3(%arg0: i32) -> (i32, i32, i32) {
    %c0_i32 = arith.constant 0 : i32
    %c0_i32_0 = arith.constant 0 : i32
    %c0_i32_1 = arith.constant 0 : i32
    return %arg0, %c0_i32, %c0_i32_0 : i32, i32, i32
  }
}

</mosaic_0001>

<llo_original>
// kernel: tpu_custom_call.1
$region0: #{tpu_custom_call.1}
  #allocation0 [shape = 'u32[]', space=smem, size = 0x4, offset = 0x4, fixed_abs, tag = 'smem constant byte address 0x4 - core index']
  #allocation1 [shape = 'u32[144,128]{1,0:T(1,128)}', space=vmem, size = 0x12000, scoped, tag = 'internal scratch']
  %s0 = inlined_call_operand.vmem [shape: f32[2,256], index: 0, kind: input, shape index: {}]
  %s1 = inlined_call_operand.vmem [shape: f32[6,2,1], index: 1, kind: input, shape index: {}]
  %s2 = inlined_call_operand.vmem [shape: f32[6,9,256], index: 2, kind: input, shape index: {}]
  %s3 = inlined_call_operand.vmem [shape: f32[6,9,256], index: 3, kind: output, shape index: {}]
  %s4 = sld [smem:[#allocation0]]
  $region22: #{tpu_custom_call.1} parent=0
    _
  %s6 = ssub.s32 1, %s4
  %s7 = scalar_select 0, %s6, %s4
  // Predicated region
  $region2: #{tpu_custom_call.1} parent=0 // pred_check
    _
  $region3: #{tpu_custom_call.1} parent=0 // pred_check_branch
    %9 = sbr.rel (0) target = $region5
  $region4: #{tpu_custom_call.1} parent=0 // pred_region
    _
  $region5: #{tpu_custom_call.1} parent=0 // pred_fallthru
    _
  // Predicated region
  $region6: #{tpu_custom_call.1} parent=0 // pred_check
    _
  $region7: #{tpu_custom_call.1} parent=0 // pred_check_branch
    %11 = sbr.rel (0) target = $region9
  $region8: #{tpu_custom_call.1} parent=0 // pred_region
    _
  $region9: #{tpu_custom_call.1} parent=0 // pred_fallthru
    _
  // Predicated region
  $region10: #{tpu_custom_call.1} parent=0 // pred_check
    _
  $region11: #{tpu_custom_call.1} parent=0 // pred_check_branch
    %13 = sbr.rel (0) target = $region13
  $region12: #{tpu_custom_call.1} parent=0 // pred_region
    _
  $region13: #{tpu_custom_call.1} parent=0 // pred_fallthru
    _
  %v14 = vld [vmem:[%s2] sm:$0xff]
  %v15 = vld [vmem:[%s2 + $0x8] sm:$0xff]
  %v16 = vld [vmem:[%s2 + $0x10] sm:$0x1]
  %v17 = vld [vmem:[%s2 + $0x18] sm:$0x1]
  %v18 = vld [vmem:[%s2 + $0x20] sm:$0xff]
  %v19 = vld [vmem:[%s2 + $0x28] sm:$0xff]
  %v20 = vld [vmem:[%s2 + $0x30] sm:$0x1]
  %v21 = vld [vmem:[%s2 + $0x38] sm:$0x1]
  %v22 = vld [vmem:[%s2 + $0x40] sm:$0xff]
  %v23 = vld [vmem:[%s2 + $0x48] sm:$0xff]
  %v24 = vld [vmem:[%s2 + $0x50] sm:$0x1]
  %v25 = vld [vmem:[%s2 + $0x58] sm:$0x1]
  %v26 = vld [vmem:[%s2 + $0x60] sm:$0xff]
  %v27 = vld [vmem:[%s2 + $0x68] sm:$0xff]
  %v28 = vld [vmem:[%s2 + $0x70] sm:$0x1]
  %v29 = vld [vmem:[%s2 + $0x78] sm:$0x1]
  %v30 = vld [vmem:[%s2 + $0x80] sm:$0xff]
  %v31 = vld [vmem:[%s2 + $0x88] sm:$0xff]
  %v32 = vld [vmem:[%s2 + $0x90] sm:$0x1]
  %v33 = vld [vmem:[%s2 + $0x98] sm:$0x1]
  %v34 = vld [vmem:[%s2 + $0xa0] sm:$0xff]
  %v35 = vld [vmem:[%s2 + $0xa8] sm:$0xff]
  %v36 = vld [vmem:[%s2 + $0xb0] sm:$0x1]
  %v37 = vld [vmem:[%s2 + $0xb8] sm:$0x1]
  %v38 = vld [vmem:[%s0] sm:$0xf]
  %v39 = vxor.u32 %v14, 2147483648
  %v40 = vxor.u32 %v15, 2147483648
  %v41 = vxor.u32 %v18, 2147483648
  %v42 = vxor.u32 %v19, 2147483648
  %v43 = vxor.u32 %v22, 2147483648
  %v44 = vxor.u32 %v23, 2147483648
  %v45 = vxor.u32 %v26, 2147483648
  %v46 = vxor.u32 %v27, 2147483648
  %v47 = vxor.u32 %v30, 2147483648
  %v48 = vxor.u32 %v31, 2147483648
  %v49 = vxor.u32 %v34, 2147483648
  %v50 = vxor.u32 %v35, 2147483648
  %v51 = vmul.f32 %v39, 1.442695
  %v52 = vpow.pop %v51
  %v53 = vmul.f32 %v40, 1.442695
  %v54 = vpow.pop %v53
  %v55 = vmul.f32 %v41, 1.442695
  %v56 = vpow.pop %v55
  %v57 = vmul.f32 %v42, 1.442695
  %v58 = vpow.pop %v57
  %v59 = vmul.f32 %v43, 1.442695
  %v60 = vpow.pop %v59
  %v61 = vmul.f32 %v44, 1.442695
  %v62 = vpow.pop %v61
  %v63 = vmul.f32 %v45, 1.442695
  %v64 = vpow.pop %v63
  %v65 = vmul.f32 %v46, 1.442695
  %v66 = vpow.pop %v65
  %v67 = vmul.f32 %v47, 1.442695
  %v68 = vpow.pop %v67
  %v69 = vmul.f32 %v48, 1.442695
  %v70 = vpow.pop %v69
  %v71 = vmul.f32 %v49, 1.442695
  %v72 = vpow.pop %v71
  %v73 = vmul.f32 %v50, 1.442695
  %v74 = vpow.pop %v73
  %v75 = vadd.f32 %v52, 1.0
  %v76 = vadd.f32 %v54, 1.0
  %v77 = vadd.f32 %v56, 1.0
  %v78 = vadd.f32 %v58, 1.0
  %v79 = vadd.f32 %v60, 1.0
  %v80 = vadd.f32 %v62, 1.0
  %v81 = vadd.f32 %v64, 1.0
  %v82 = vadd.f32 %v66, 1.0
  %v83 = vadd.f32 %v68, 1.0
  %v84 = vadd.f32 %v70, 1.0
  %v85 = vadd.f32 %v72, 1.0
  %v86 = vadd.f32 %v74, 1.0
  %v87 = vrcp.pop %v75
  %v88 = vmul.f32 1.0, %v87
  %v89 = vrcp.pop %v76
  %v90 = vmul.f32 1.0, %v89
  %v91 = vrcp.pop %v77
  %v92 = vmul.f32 1.0, %v91
  %v93 = vrcp.pop %v78
  %v94 = vmul.f32 1.0, %v93
  %v95 = vrcp.pop %v79
  %v96 = vmul.f32 1.0, %v95
  %v97 = vrcp.pop %v80
  %v98 = vmul.f32 1.0, %v97
  %v99 = vrcp.pop %v81
  %v100 = vmul.f32 1.0, %v99
  %v101 = vrcp.pop %v82
  %v102 = vmul.f32 1.0, %v101
  %v103 = vrcp.pop %v83
  %v104 = vmul.f32 1.0, %v103
  %v105 = vrcp.pop %v84
  %v106 = vmul.f32 1.0, %v105
  %v107 = vrcp.pop %v85
  %v108 = vmul.f32 1.0, %v107
  %v109 = vrcp.pop %v86
  %v110 = vmul.f32 1.0, %v109
  %v111 = vmul.f32 %v88, 4.0
  %v112 = vmul.f32 %v90, 4.0
  %v113 = vmul.f32 %v92, 4.0
  %v114 = vmul.f32 %v94, 4.0
  %v115 = vmul.f32 %v96, 4.0
  %v116 = vmul.f32 %v98, 4.0
  %v117 = vmul.f32 %v100, 4.0
  %v118 = vmul.f32 %v102, 4.0
  %v119 = vmul.f32 %v104, 4.0
  %v120 = vmul.f32 %v106, 4.0
  %v121 = vmul.f32 %v108, 4.0
  %v122 = vmul.f32 %v110, 4.0
  %v125 = vunpack.c.l.s4 1983009808
  %v126 = vunpack.c.0.s8 %v125
  %v127 = vlaneseq
  %v128 = vshrl.u32 %v127, 7
  %v129 = vsub.s32 %v126, %v128
  %v130 = vrot.slane %v38, %v129
  %v131 = vcombine.high %v130, %v130
  %v134 = vadd.f32 %v111, %v130
  %v135 = vadd.f32 %v112, %v131
  %v136 = vadd.f32 %v113, %v130
  %v137 = vadd.f32 %v114, %v131
  %v138 = vadd.f32 %v115, %v130
  %v139 = vadd.f32 %v116, %v131
  %v140 = vadd.f32 %v117, %v130
  %v141 = vadd.f32 %v118, %v131
  %v142 = vadd.f32 %v119, %v130
  %v143 = vadd.f32 %v120, %v131
  %v144 = vadd.f32 %v121, %v130
  %v145 = vadd.f32 %v122, %v131
  %146 = vst [vmem:[%s3] sm:$0x3] %v134
  %147 = vst [vmem:[%s3 + $0x8] sm:$0x3] %v135
  %148 = vst [vmem:[%s3 + $0x20] sm:$0x3] %v136
  %149 = vst [vmem:[%s3 + $0x28] sm:$0x3] %v137
  %150 = vst [vmem:[%s3 + $0x40] sm:$0x3] %v138
  %151 = vst [vmem:[%s3 + $0x48] sm:$0x3] %v139
  %152 = vst [vmem:[%s3 + $0x60] sm:$0x3] %v140
  %153 = vst [vmem:[%s3 + $0x68] sm:$0x3] %v141
  %154 = vst [vmem:[%s3 + $0x80] sm:$0x3] %v142
  %155 = vst [vmem:[%s3 + $0x88] sm:$0x3] %v143
  %156 = vst [vmem:[%s3 + $0xa0] sm:$0x3] %v144
  %157 = vst [vmem:[%s3 + $0xa8] sm:$0x3] %v145
  %v158 = vmul.f32 %v14, 1.442695
  %v159 = vpow.pop %v158
  %v160 = vmul.f32 %v15, 1.442695
  %v161 = vpow.pop %v160
  %v162 = vmul.f32 %v18, 1.442695
  %v163 = vpow.pop %v162
  %v164 = vmul.f32 %v19, 1.442695
  %v165 = vpow.pop %v164
  %v166 = vmul.f32 %v22, 1.442695
  %v167 = vpow.pop %v166
  %v168 = vmul.f32 %v23, 1.442695
  %v169 = vpow.pop %v168
  %v170 = vmul.f32 %v26, 1.442695
  %v171 = vpow.pop %v170
  %v172 = vmul.f32 %v27, 1.442695
  %v173 = vpow.pop %v172
  %v174 = vmul.f32 %v30, 1.442695
  %v175 = vpow.pop %v174
  %v176 = vmul.f32 %v31, 1.442695
  %v177 = vpow.pop %v176
  %v178 = vmul.f32 %v34, 1.442695
  %v179 = vpow.pop %v178
  %v180 = vmul.f32 %v35, 1.442695
  %v181 = vpow.pop %v180
  %v182 = vld [vmem:[%s1] sm:$0x3]
  %v183 = vld [vmem:[%s1 + $0x2] sm:$0x3]
  %v184 = vld [vmem:[%s1 + $0x4] sm:$0x3]
  %v185 = vld [vmem:[%s1 + $0x6] sm:$0x3]
  %v186 = vld [vmem:[%s1 + $0x8] sm:$0x3]
  %v187 = vld [vmem:[%s1 + $0xa] sm:$0x3]
  %189 = vset.pattern.permute.xlu0 0
  %190 = vperm.xlu0 %189, %v182
  %v191 = vpop.permute.xlu0 %190
  %193 = vset.pattern.permute.xlu0 0
  %194 = vperm.xlu0 %193, %v183
  %v195 = vpop.permute.xlu0 %194
  %197 = vset.pattern.permute.xlu0 0
  %198 = vperm.xlu0 %197, %v184
  %v199 = vpop.permute.xlu0 %198
  %201 = vset.pattern.permute.xlu0 0
  %202 = vperm.xlu0 %201, %v185
  %v203 = vpop.permute.xlu0 %202
  %205 = vset.pattern.permute.xlu0 0
  %206 = vperm.xlu0 %205, %v186
  %v207 = vpop.permute.xlu0 %206
  %209 = vset.pattern.permute.xlu0 0
  %210 = vperm.xlu0 %209, %v187
  %v211 = vpop.permute.xlu0 %210
  %v212 = vrot.slane %v191, 6
  %v213 = vrot.slane %v195, 6
  %v214 = vrot.slane %v199, 6
  %v215 = vrot.slane %v203, 6
  %v216 = vrot.slane %v207, 6
  %v217 = vrot.slane %v211, 6
  %v224 = vmul.f32 %v159, %v212
  %v225 = vmul.f32 %v161, %v212
  %v226 = vmul.f32 %v163, %v213
  %v227 = vmul.f32 %v165, %v213
  %v228 = vmul.f32 %v167, %v214
  %v229 = vmul.f32 %v169, %v214
  %v230 = vmul.f32 %v171, %v215
  %v231 = vmul.f32 %v173, %v215
  %v232 = vmul.f32 %v175, %v216
  %v233 = vmul.f32 %v177, %v216
  %v234 = vmul.f32 %v179, %v217
  %v235 = vmul.f32 %v181, %v217
  %236 = vst [vmem:[%s3] sm:$0xc] %v224
  %237 = vst [vmem:[%s3 + $0x8] sm:$0xc] %v225
  %238 = vst [vmem:[%s3 + $0x20] sm:$0xc] %v226
  %239 = vst [vmem:[%s3 + $0x28] sm:$0xc] %v227
  %240 = vst [vmem:[%s3 + $0x40] sm:$0xc] %v228
  %241 = vst [vmem:[%s3 + $0x48] sm:$0xc] %v229
  %242 = vst [vmem:[%s3 + $0x60] sm:$0xc] %v230
  %243 = vst [vmem:[%s3 + $0x68] sm:$0xc] %v231
  %244 = vst [vmem:[%s3 + $0x80] sm:$0xc] %v232
  %245 = vst [vmem:[%s3 + $0x88] sm:$0xc] %v233
  %246 = vst [vmem:[%s3 + $0xa0] sm:$0xc] %v234
  %247 = vst [vmem:[%s3 + $0xa8] sm:$0xc] %v235
  %v248 = vxor.u32 %v16, 2147483648
  %v249 = vxor.u32 %v17, 2147483648
  %v250 = vxor.u32 %v20, 2147483648
  %v251 = vxor.u32 %v21, 2147483648
  %v252 = vxor.u32 %v24, 2147483648
  %v253 = vxor.u32 %v25, 2147483648
  %v254 = vxor.u32 %v28, 2147483648
  %v255 = vxor.u32 %v29, 2147483648
  %v256 = vxor.u32 %v32, 2147483648
  %v257 = vxor.u32 %v33, 2147483648
  %v258 = vxor.u32 %v36, 2147483648
  %v259 = vxor.u32 %v37, 2147483648
  %v260 = vmul.f32 %v248, 1.442695
  %v261 = vpow.pop %v260
  %v262 = vmul.f32 %v249, 1.442695
  %v263 = vpow.pop %v262
  %v264 = vmul.f32 %v250, 1.442695
  %v265 = vpow.pop %v264
  %v266 = vmul.f32 %v251, 1.442695
  %v267 = vpow.pop %v266
  %v268 = vmul.f32 %v252, 1.442695
  %v269 = vpow.pop %v268
  %v270 = vmul.f32 %v253, 1.442695
  %v271 = vpow.pop %v270
  %v272 = vmul.f32 %v254, 1.442695
  %v273 = vpow.pop %v272
  %v274 = vmul.f32 %v255, 1.442695
  %v275 = vpow.pop %v274
  %v276 = vmul.f32 %v256, 1.442695
  %v277 = vpow.pop %v276
  %v278 = vmul.f32 %v257, 1.442695
  %v279 = vpow.pop %v278
  %v280 = vmul.f32 %v258, 1.442695
  %v281 = vpow.pop %v280
  %v282 = vmul.f32 %v259, 1.442695
  %v283 = vpow.pop %v282
  %v284 = vadd.f32 %v261, 1.0
  %v285 = vadd.f32 %v263, 1.0
  %v286 = vadd.f32 %v265, 1.0
  %v287 = vadd.f32 %v267, 1.0
  %v288 = vadd.f32 %v269, 1.0
  %v289 = vadd.f32 %v271, 1.0
  %v290 = vadd.f32 %v273, 1.0
  %v291 = vadd.f32 %v275, 1.0
  %v292 = vadd.f32 %v277, 1.0
  %v293 = vadd.f32 %v279, 1.0
  %v294 = vadd.f32 %v281, 1.0
  %v295 = vadd.f32 %v283, 1.0
  %v296 = vrcp.pop %v284
  %v297 = vmul.f32 1.0, %v296
  %v298 = vrcp.pop %v285
  %v299 = vmul.f32 1.0, %v298
  %v300 = vrcp.pop %v286
  %v301 = vmul.f32 1.0, %v300
  %v302 = vrcp.pop %v287
  %v303 = vmul.f32 1.0, %v302
  %v304 = vrcp.pop %v288
  %v305 = vmul.f32 1.0, %v304
  %v306 = vrcp.pop %v289
  %v307 = vmul.f32 1.0, %v306
  %v308 = vrcp.pop %v290
  %v309 = vmul.f32 1.0, %v308
  %v310 = vrcp.pop %v291
  %v311 = vmul.f32 1.0, %v310
  %v312 = vrcp.pop %v292
  %v313 = vmul.f32 1.0, %v312
  %v314 = vrcp.pop %v293
  %v315 = vmul.f32 1.0, %v314
  %v316 = vrcp.pop %v294
  %v317 = vmul.f32 1.0, %v316
  %v318 = vrcp.pop %v295
  %v319 = vmul.f32 1.0, %v318
  %320 = vst [vmem:[%s3] sm:$0xf0] %v88
  %321 = vst [vmem:[%s3 + $0x8] sm:$0xf0] %v90
  %322 = vst [vmem:[%s3 + $0x10] sm:$0x1] %v297
  %323 = vst [vmem:[%s3 + $0x18] sm:$0x1] %v299
  %324 = vst [vmem:[%s3 + $0x20] sm:$0xf0] %v92
  %325 = vst [vmem:[%s3 + $0x28] sm:$0xf0] %v94
  %326 = vst [vmem:[%s3 + $0x30] sm:$0x1] %v301
  %327 = vst [vmem:[%s3 + $0x38] sm:$0x1] %v303
  %328 = vst [vmem:[%s3 + $0x40] sm:$0xf0] %v96
  %329 = vst [vmem:[%s3 + $0x48] sm:$0xf0] %v98
  %330 = vst [vmem:[%s3 + $0x50] sm:$0x1] %v305
  %331 = vst [vmem:[%s3 + $0x58] sm:$0x1] %v307
  %332 = vst [vmem:[%s3 + $0x60] sm:$0xf0] %v100
  %333 = vst [vmem:[%s3 + $0x68] sm:$0xf0] %v102
  %334 = vst [vmem:[%s3 + $0x70] sm:$0x1] %v309
  %335 = vst [vmem:[%s3 + $0x78] sm:$0x1] %v311
  %336 = vst [vmem:[%s3 + $0x80] sm:$0xf0] %v104
  %337 = vst [vmem:[%s3 + $0x88] sm:$0xf0] %v106
  %338 = vst [vmem:[%s3 + $0x90] sm:$0x1] %v313
  %339 = vst [vmem:[%s3 + $0x98] sm:$0x1] %v315
  %340 = vst [vmem:[%s3 + $0xa0] sm:$0xf0] %v108
  %341 = vst [vmem:[%s3 + $0xa8] sm:$0xf0] %v110
  %342 = vst [vmem:[%s3 + $0xb0] sm:$0x1] %v317
  %343 = vst [vmem:[%s3 + $0xb8] sm:$0x1] %v319
  // Predicated region
  $region14: #{tpu_custom_call.1} parent=0 // pred_check
    _
  $region15: #{tpu_custom_call.1} parent=0 // pred_check_branch
    %345 = sbr.rel (0) target = $region17
  $region16: #{tpu_custom_call.1} parent=0 // pred_region
    _
  $region17: #{tpu_custom_call.1} parent=0 // pred_fallthru
    _
  // Predicated region
  $region18: #{tpu_custom_call.1} parent=0 // pred_check
    _
  $region19: #{tpu_custom_call.1} parent=0 // pred_check_branch
    %347 = sbr.rel (0) target = $region21
  $region20: #{tpu_custom_call.1} parent=0 // pred_region
    _
  $region21: #{tpu_custom_call.1} parent=0 // pred_fallthru
    _

</llo_original>
